<compile_context>
chip_gen: v7x
topology: tpu7x:2x2x1
jax: 0.10.0
libtpu: 0.0.40
codegen_flags: <defaults>
</compile_context>

<pallas_src>
import functools

import jax
import jax.numpy as jnp
from jax import lax
from jax.experimental import pallas as pl
from jax.experimental.pallas import tpu as pltpu


def _random_pool_kernel(sel_ref, x_ref, compact_ref, o_ref, *, ct, w):
    # sel_ref:     (rt, w)        int32, sel[i, 2j] == sel[i, 2j+1] == k in [0, 4)
    # x_ref:       (ct, rt, 2*w)  each row = [top image row | bottom image row] of a patch-row
    # compact_ref: (w, out_w)     constant 0/1 even-lane selection matrix, x.dtype
    # o_ref:       (ct, rt, out_w)
    sel = sel_ref[...]
    row_bot = sel >= 2          # bit1 of k: bottom row of the 2x2 patch
    col_odd = (sel & 1) == 1    # bit0 of k: right column of the 2x2 patch
    compact = compact_ref[...]

    def body(ci, carry):
        xtb = x_ref[ci]                  # (rt, 2*w): one channel slab
        xt = xtb[:, :w]                  # top rows of the patches
        xb = xtb[:, w:]                  # bottom rows of the patches
        xr = jnp.where(row_bot, xb, xt)  # row choice, native dtype
        # Lane shift-left by 1: the wraparound value lands in an odd lane, which the
        # even-lane compaction below discards (keep this invariant if compaction changes).
        xr_s = jnp.concatenate([xr[:, 1:], xr[:, :1]], axis=1)
        xc = jnp.where(col_odd, xr_s, xr)  # even lanes now hold the chosen element
        # Compact even lanes (w -> out_w) on the otherwise idle MXU; 0/1 matrix in the
        # native dtype is bit-exact, accumulate in f32.
        out = jnp.dot(xc, compact, preferred_element_type=jnp.float32)
        o_ref[ci] = out.astype(o_ref.dtype)
        return carry

    lax.fori_loop(0, ct, body, 0, unroll=(ct <= 8))


# Per-step budgets (bytes).  The x block is double-buffered by the Pallas pipeline and
# the per-slab kernel intermediates add ~2.5x one slab, so 6 MiB block + 2 MiB slab
# keeps the total VMEM working set comfortably inside a 32 MiB scoped limit on every
# generation (v5e/v6e 128 MiB physical, v7x 64 MiB physical).
_SLAB_BUDGET = 2 << 20     # cap on rt * 2*w * itemsize  (bounds in-kernel temps)
_BLOCK_BUDGET = 6 << 20    # cap on ct * rt * 2*w * itemsize (input block)
_VMEM_LIMIT = 32 * 1024 * 1024


def total_random_2d(x, key, *, num=1, kernel_size=(2, 2), stride=2, return_indices=False):
    """JAX/Pallas equivalent of TotalRandom2D.forward (num must be 1, the module default)."""
    assert num == 1, "PyTorch module only reshapes correctly for num == 1"
    kh, kw = kernel_size
    b, c, h, w = x.shape
    assert kh == 2 and kw == 2 and stride == 2 and h % 2 == 0 and w % 2 == 0, \
        "non-overlapping 2x2 patches assumed"
    # TODO(synk): general (overlapping) kernel_size/stride combos would need a true unfold.
    assert jnp.issubdtype(x.dtype, jnp.floating), \
        "float inputs only"  # TODO(synk): integers would need a non-MXU gather path
    out_h, out_w = h // 2, w // 2

    # One uniform draw in [0,4) per (batch, output position), shared across channels.
    k_idx = jax.random.randint(key, (b, out_h, out_w), 0, 4, dtype=jnp.int32)
    sel = jnp.repeat(k_idx, 2, axis=-1)            # (b, out_h, w), tiny vs. x

    # Free (no-copy) view: (b, c, h, w) -> (b*c, out_h, 2*w); each fused row holds the
    # top and bottom image row of one patch-row of one channel.
    x3 = x.reshape(b * c, out_h, 2 * w)

    itemsize = jnp.dtype(x.dtype).itemsize
    row_bytes = 2 * w * itemsize
    chan_bytes = out_h * row_bytes

    # --- row tile rt (only needed when a single channel is already large) ---
    if chan_bytes <= _SLAB_BUDGET:
        rt = out_h
    else:
        cap = max(1, _SLAB_BUDGET // row_bytes)
        rt = out_h  # fallback; TODO(synk): pathological out_h with no mult-of-8 divisor
        for d in range(min(out_h, cap), 0, -1):
            if out_h % d == 0 and d % 8 == 0:      # keep the (8,128) BlockSpec rule
                rt = d
                break
    n_rt = out_h // rt
    slab_bytes = rt * row_bytes

    # --- channel tile ct: largest divisor of c keeping the input block in budget ---
    divs = [d for d in range(c, 0, -1) if c % d == 0]
    ct = 1
    for d in divs:
        if d * slab_bytes <= _BLOCK_BUDGET:
            ct = d
            break
    # v7x megacore balance: prefer >= 4 grid steps when blocks are still non-trivial.
    while ct > 1 and b * n_rt * (c // ct) < 4 and ct * slab_bytes > (512 << 10):
        ct = max(d for d in divs if d < ct)
    n_ct = c // ct

    # Constant even-lane selection matrix, built once in the wrapper and DMA'd once
    # (its block index is always (0, 0), so Pallas never re-fetches it).
    compact = (jnp.arange(w, dtype=jnp.int32)[:, None]
               == 2 * jnp.arange(out_w, dtype=jnp.int32)[None, :]).astype(x.dtype)

    kernel = functools.partial(_random_pool_kernel, ct=ct, w=w)

    out3 = pl.pallas_call(
        kernel,
        grid=(b, n_rt, n_ct),                      # channel tiles innermost -> sel reused
        in_specs=[
            # random choices: same block for every channel tile of a (batch, row-tile)
            pl.BlockSpec((None, rt, w), lambda bi, ri, ci: (bi, ri, 0)),
            # ct channel slabs of rt patch-rows
            pl.BlockSpec((ct, rt, 2 * w), lambda bi, ri, ci: (bi * n_ct + ci, ri, 0)),
            # constant compaction matrix, fetched exactly once
            pl.BlockSpec((w, out_w), lambda bi, ri, ci: (0, 0)),
        ],
        out_specs=pl.BlockSpec((ct, rt, out_w), lambda bi, ri, ci: (bi * n_ct + ci, ri, 0)),
        out_shape=jax.ShapeDtypeStruct((b * c, out_h, out_w), x.dtype),
        compiler_params=pltpu.CompilerParams(
            dimension_semantics=("parallel", "parallel", "parallel"),
            vmem_limit_bytes=_VMEM_LIMIT,
        ),
    )(sel, x3, compact)

    out = out3.reshape(b, c, out_h, out_w)
    if return_indices:
        return out, k_idx
    return out


if __name__ == "__main__":
    root = jax.random.PRNGKey(0)
    kx, ks = jax.random.split(root)
    b, c, h, w = 2, 4, 16, 16
    x = jax.random.normal(kx, (b, c, h, w), dtype=jnp.float32)

    out, k_idx = total_random_2d(x, ks, return_indices=True)
    out = jax.block_until_ready(out)
    assert out.shape == (b, c, h // 2, w // 2), out.shape

    # Reference: gather the randomly chosen patch position (same index for all channels).
    oh, ow = h // 2, w // 2
    x4 = x.reshape(b, c, oh, 2, ow, 2).transpose(0, 1, 3, 5, 2, 4).reshape(b, c, 4, oh, ow)
    ref = jnp.take_along_axis(x4, k_idx[:, None, None, :, :], axis=2)[:, :, 0]
    assert bool(jnp.allclose(out, ref, rtol=1e-5, atol=1e-5)), \
        float(jnp.max(jnp.abs(out - ref)))

    print("KERNEL_OK")
</pallas_src>

<mosaic_0001>
module attributes {stable_mosaic.version = 11 : i64} {
  func.func @_random_pool_kernel(%arg0: i32, %arg1: i32, %arg2: i32, %arg3: memref<1x8x16xi32, #tpu.memory_space<vmem>>, %arg4: memref<4x8x32xf32, #tpu.memory_space<vmem>>, %arg5: memref<16x8xf32, #tpu.memory_space<vmem>>, %arg6: memref<4x8x8xf32, #tpu.memory_space<vmem>>) attributes {dimension_semantics = [#tpu.dimension_semantics<parallel>, #tpu.dimension_semantics<parallel>, #tpu.dimension_semantics<parallel>], iteration_bounds = array<i64: 2, 1, 1>, scalar_prefetch = 0 : i64, scratch_operands = 0 : i64, tpu.core_type = #tpu.core_type<tc>, window_params = [{transform_indices = @transform_0, window_bounds = array<i64: 1, 8, 16>}, {transform_indices = @transform_1, window_bounds = array<i64: 4, 8, 32>}, {pipeline_mode = #tpu.pipeline_mode<synchronous>, transform_indices = @transform_2, window_bounds = array<i64: 16, 8>}, {transform_indices = @transform_3, window_bounds = array<i64: 4, 8, 8>}]} {
    %c0 = arith.constant 0 : index
    %c0_0 = arith.constant 0 : index
    %c0_1 = arith.constant 0 : index
    %0 = vector.load %arg3[%c0, %c0_0, %c0_1] : memref<1x8x16xi32, #tpu.memory_space<vmem>>, vector<1x8x16xi32>
    %1 = vector.shape_cast %0 : vector<1x8x16xi32> to vector<8x16xi32>
    %c2_i32 = arith.constant 2 : i32
    %2 = vector.broadcast %c2_i32 : i32 to vector<8x16xi32>
    %3 = arith.cmpi sge, %1, %2 : vector<8x16xi32>
    %c1_i32 = arith.constant 1 : i32
    %4 = vector.broadcast %c1_i32 : i32 to vector<8x16xi32>
    %5 = arith.andi %1, %4 : vector<8x16xi32>
    %c1_i32_2 = arith.constant 1 : i32
    %6 = vector.broadcast %c1_i32_2 : i32 to vector<8x16xi32>
    %7 = arith.cmpi eq, %5, %6 : vector<8x16xi32>
    %c0_3 = arith.constant 0 : index
    %c0_4 = arith.constant 0 : index
    %8 = vector.load %arg5[%c0_3, %c0_4] : memref<16x8xf32, #tpu.memory_space<vmem>>, vector<16x8xf32>
    %c0_i32 = arith.constant 0 : i32
    %9 = arith.index_cast %c0_i32 : i32 to index
    %c0_5 = arith.constant 0 : index
    %c0_6 = arith.constant 0 : index
    %10 = vector.load %arg4[%9, %c0_5, %c0_6] : memref<4x8x32xf32, #tpu.memory_space<vmem>>, vector<1x8x32xf32>
    %11 = vector.shape_cast %10 : vector<1x8x32xf32> to vector<8x32xf32>
    %12 = vector.extract_strided_slice %11 {offsets = [0, 0], sizes = [8, 16], strides = [1, 1]} : vector<8x32xf32> to vector<8x16xf32>
    %13 = vector.extract_strided_slice %11 {offsets = [0, 16], sizes = [8, 16], strides = [1, 1]} : vector<8x32xf32> to vector<8x16xf32>
    %14 = arith.select %3, %13, %12 : vector<8x16xi1>, vector<8x16xf32>
    %15 = vector.extract_strided_slice %14 {offsets = [0, 1], sizes = [8, 15], strides = [1, 1]} : vector<8x16xf32> to vector<8x15xf32>
    %16 = vector.extract_strided_slice %14 {offsets = [0, 0], sizes = [8, 1], strides = [1, 1]} : vector<8x16xf32> to vector<8x1xf32>
    %17 = tpu.concatenate %15, %16 in 1 : vector<8x15xf32>, vector<8x1xf32> -> vector<8x16xf32>
    %18 = arith.select %7, %17, %14 : vector<8x16xi1>, vector<8x16xf32>
    %cst = arith.constant dense<0.000000e+00> : vector<8x8xf32>
    %19 = tpu.matmul %18, %8, %cst {dimension_numbers = #tpu.dot_dimension_numbers<[1], [0], [0], [1], [0, 0, 1, 1], [], []>} : vector<8x16xf32>, vector<16x8xf32>, vector<8x8xf32> -> vector<8x8xf32>
    %20 = arith.index_cast %c0_i32 : i32 to index
    %c0_7 = arith.constant 0 : index
    %c0_8 = arith.constant 0 : index
    %21 = vector.load %arg6[%20, %c0_7, %c0_8] : memref<4x8x8xf32, #tpu.memory_space<vmem>>, vector<1x8x8xf32>
    %22 = vector.shape_cast %21 : vector<1x8x8xf32> to vector<8x8xf32>
    %23 = vector.shape_cast %19 : vector<8x8xf32> to vector<1x8x8xf32>
    tpu.vector_store %arg6[%20, %c0_7, %c0_8], %23 {strides = array<i32>} : memref<4x8x8xf32, #tpu.memory_space<vmem>>, vector<1x8x8xf32>,
    %c1_i32_9 = arith.constant 1 : i32
    %24 = arith.index_cast %c1_i32_9 : i32 to index
    %c0_10 = arith.constant 0 : index
    %c0_11 = arith.constant 0 : index
    %25 = vector.load %arg4[%24, %c0_10, %c0_11] : memref<4x8x32xf32, #tpu.memory_space<vmem>>, vector<1x8x32xf32>
    %26 = vector.shape_cast %25 : vector<1x8x32xf32> to vector<8x32xf32>
    %27 = vector.extract_strided_slice %26 {offsets = [0, 0], sizes = [8, 16], strides = [1, 1]} : vector<8x32xf32> to vector<8x16xf32>
    %28 = vector.extract_strided_slice %26 {offsets = [0, 16], sizes = [8, 16], strides = [1, 1]} : vector<8x32xf32> to vector<8x16xf32>
    %29 = arith.select %3, %28, %27 : vector<8x16xi1>, vector<8x16xf32>
    %30 = vector.extract_strided_slice %29 {offsets = [0, 1], sizes = [8, 15], strides = [1, 1]} : vector<8x16xf32> to vector<8x15xf32>
    %31 = vector.extract_strided_slice %29 {offsets = [0, 0], sizes = [8, 1], strides = [1, 1]} : vector<8x16xf32> to vector<8x1xf32>
    %32 = tpu.concatenate %30, %31 in 1 : vector<8x15xf32>, vector<8x1xf32> -> vector<8x16xf32>
    %33 = arith.select %7, %32, %29 : vector<8x16xi1>, vector<8x16xf32>
    %cst_12 = arith.constant dense<0.000000e+00> : vector<8x8xf32>
    %34 = tpu.matmul %33, %8, %cst_12 {dimension_numbers = #tpu.dot_dimension_numbers<[1], [0], [0], [1], [0, 0, 1, 1], [], []>} : vector<8x16xf32>, vector<16x8xf32>, vector<8x8xf32> -> vector<8x8xf32>
    %35 = arith.index_cast %c1_i32_9 : i32 to index
    %c0_13 = arith.constant 0 : index
    %c0_14 = arith.constant 0 : index
    %36 = vector.load %arg6[%35, %c0_13, %c0_14] : memref<4x8x8xf32, #tpu.memory_space<vmem>>, vector<1x8x8xf32>
    %37 = vector.shape_cast %36 : vector<1x8x8xf32> to vector<8x8xf32>
    %38 = vector.shape_cast %34 : vector<8x8xf32> to vector<1x8x8xf32>
    tpu.vector_store %arg6[%35, %c0_13, %c0_14], %38 {strides = array<i32>} : memref<4x8x8xf32, #tpu.memory_space<vmem>>, vector<1x8x8xf32>,
    %c2_i32_15 = arith.constant 2 : i32
    %39 = arith.index_cast %c2_i32_15 : i32 to index
    %c0_16 = arith.constant 0 : index
    %c0_17 = arith.constant 0 : index
    %40 = vector.load %arg4[%39, %c0_16, %c0_17] : memref<4x8x32xf32, #tpu.memory_space<vmem>>, vector<1x8x32xf32>
    %41 = vector.shape_cast %40 : vector<1x8x32xf32> to vector<8x32xf32>
    %42 = vector.extract_strided_slice %41 {offsets = [0, 0], sizes = [8, 16], strides = [1, 1]} : vector<8x32xf32> to vector<8x16xf32>
    %43 = vector.extract_strided_slice %41 {offsets = [0, 16], sizes = [8, 16], strides = [1, 1]} : vector<8x32xf32> to vector<8x16xf32>
    %44 = arith.select %3, %43, %42 : vector<8x16xi1>, vector<8x16xf32>
    %45 = vector.extract_strided_slice %44 {offsets = [0, 1], sizes = [8, 15], strides = [1, 1]} : vector<8x16xf32> to vector<8x15xf32>
    %46 = vector.extract_strided_slice %44 {offsets = [0, 0], sizes = [8, 1], strides = [1, 1]} : vector<8x16xf32> to vector<8x1xf32>
    %47 = tpu.concatenate %45, %46 in 1 : vector<8x15xf32>, vector<8x1xf32> -> vector<8x16xf32>
    %48 = arith.select %7, %47, %44 : vector<8x16xi1>, vector<8x16xf32>
    %cst_18 = arith.constant dense<0.000000e+00> : vector<8x8xf32>
    %49 = tpu.matmul %48, %8, %cst_18 {dimension_numbers = #tpu.dot_dimension_numbers<[1], [0], [0], [1], [0, 0, 1, 1], [], []>} : vector<8x16xf32>, vector<16x8xf32>, vector<8x8xf32> -> vector<8x8xf32>
    %50 = arith.index_cast %c2_i32_15 : i32 to index
    %c0_19 = arith.constant 0 : index
    %c0_20 = arith.constant 0 : index
    %51 = vector.load %arg6[%50, %c0_19, %c0_20] : memref<4x8x8xf32, #tpu.memory_space<vmem>>, vector<1x8x8xf32>
    %52 = vector.shape_cast %51 : vector<1x8x8xf32> to vector<8x8xf32>
    %53 = vector.shape_cast %49 : vector<8x8xf32> to vector<1x8x8xf32>
    tpu.vector_store %arg6[%50, %c0_19, %c0_20], %53 {strides = array<i32>} : memref<4x8x8xf32, #tpu.memory_space<vmem>>, vector<1x8x8xf32>,
    %c3_i32 = arith.constant 3 : i32
    %54 = arith.index_cast %c3_i32 : i32 to index
    %c0_21 = arith.constant 0 : index
    %c0_22 = arith.constant 0 : index
    %55 = vector.load %arg4[%54, %c0_21, %c0_22] : memref<4x8x32xf32, #tpu.memory_space<vmem>>, vector<1x8x32xf32>
    %56 = vector.shape_cast %55 : vector<1x8x32xf32> to vector<8x32xf32>
    %57 = vector.extract_strided_slice %56 {offsets = [0, 0], sizes = [8, 16], strides = [1, 1]} : vector<8x32xf32> to vector<8x16xf32>
    %58 = vector.extract_strided_slice %56 {offsets = [0, 16], sizes = [8, 16], strides = [1, 1]} : vector<8x32xf32> to vector<8x16xf32>
    %59 = arith.select %3, %58, %57 : vector<8x16xi1>, vector<8x16xf32>
    %60 = vector.extract_strided_slice %59 {offsets = [0, 1], sizes = [8, 15], strides = [1, 1]} : vector<8x16xf32> to vector<8x15xf32>
    %61 = vector.extract_strided_slice %59 {offsets = [0, 0], sizes = [8, 1], strides = [1, 1]} : vector<8x16xf32> to vector<8x1xf32>
    %62 = tpu.concatenate %60, %61 in 1 : vector<8x15xf32>, vector<8x1xf32> -> vector<8x16xf32>
    %63 = arith.select %7, %62, %59 : vector<8x16xi1>, vector<8x16xf32>
    %cst_23 = arith.constant dense<0.000000e+00> : vector<8x8xf32>
    %64 = tpu.matmul %63, %8, %cst_23 {dimension_numbers = #tpu.dot_dimension_numbers<[1], [0], [0], [1], [0, 0, 1, 1], [], []>} : vector<8x16xf32>, vector<16x8xf32>, vector<8x8xf32> -> vector<8x8xf32>
    %65 = arith.index_cast %c3_i32 : i32 to index
    %c0_24 = arith.constant 0 : index
    %c0_25 = arith.constant 0 : index
    %66 = vector.load %arg6[%65, %c0_24, %c0_25] : memref<4x8x8xf32, #tpu.memory_space<vmem>>, vector<1x8x8xf32>
    %67 = vector.shape_cast %66 : vector<1x8x8xf32> to vector<8x8xf32>
    %68 = vector.shape_cast %64 : vector<8x8xf32> to vector<1x8x8xf32>
    tpu.vector_store %arg6[%65, %c0_24, %c0_25], %68 {strides = array<i32>} : memref<4x8x8xf32, #tpu.memory_space<vmem>>, vector<1x8x8xf32>,
    %c4_i32 = arith.constant 4 : i32
    return
  }
  func.func @transform_0(%arg0: i32, %arg1: i32, %arg2: i32) -> (i32, i32, i32) {
    %c0_i32 = arith.constant 0 : i32
    %c0_i32_0 = arith.constant 0 : i32
    return %arg0, %arg1, %c0_i32 : i32, i32, i32
  }
  func.func @transform_1(%arg0: i32, %arg1: i32, %arg2: i32) -> (i32, i32, i32) {
    %c1_i32 = arith.constant 1 : i32
    %0 = arith.muli %arg0, %c1_i32 : i32
    %1 = arith.addi %0, %arg2 : i32
    %c0_i32 = arith.constant 0 : i32
    %c0_i32_0 = arith.constant 0 : i32
    return %1, %arg1, %c0_i32 : i32, i32, i32
  }
  func.func @transform_2(%arg0: i32, %arg1: i32, %arg2: i32) -> (i32, i32) {
    %c0_i32 = arith.constant 0 : i32
    %c0_i32_0 = arith.constant 0 : i32
    %c0_i32_1 = arith.constant 0 : i32
    return %c0_i32, %c0_i32_0 : i32, i32
  }
  func.func @transform_3(%arg0: i32, %arg1: i32, %arg2: i32) -> (i32, i32, i32) {
    %c1_i32 = arith.constant 1 : i32
    %0 = arith.muli %arg0, %c1_i32 : i32
    %1 = arith.addi %0, %arg2 : i32
    %c0_i32 = arith.constant 0 : i32
    %c0_i32_0 = arith.constant 0 : i32
    return %1, %arg1, %c0_i32 : i32, i32, i32
  }
}

</mosaic_0001>

<llo_original>
// kernel: tpu_custom_call.1
$region0: #{tpu_custom_call.1}
  #allocation0 [shape = 'u32[]', space=smem, size = 0x4, offset = 0x4, fixed_abs, tag = 'smem constant byte address 0x4 - core index']
  #allocation1 [shape = 'u32[144,128]{1,0:T(1,128)}', space=vmem, size = 0x12000, scoped, tag = 'internal scratch']
  %s0 = inlined_call_operand.vmem [shape: s32[2,8,16], index: 0, kind: input, shape index: {}]
  %s1 = inlined_call_operand.hbm [shape: f32[8,8,32], index: 1, kind: input, shape index: {}]
  %s2 = inlined_call_operand.vmem [shape: f32[16,8], index: 2, kind: input, shape index: {}]
  %s3 = inlined_call_operand.hbm [shape: f32[8,8,8], index: 3, kind: output, shape index: {}]
  %s4 = sld [smem:[#allocation0]]
  $region49: #{tpu_custom_call.1} parent=0
    _
  %s6 = ssub.s32 1, %s4
  %s7 = scalar_select 0, %s6, %s4
  $region1: #{tpu_custom_call.1} parent=0
    #allocation2 [shape = 'u8[32768]{0}', space=vmem, size = 0x8000, scoped, tag = 'input window, operand 1']
    #allocation3 [shape = 's32[2]{0}', space=sflag, size = 0x8, scoped, tag = 'scoped memory for tpu_custom_call.1']
    #allocation4 [shape = 's32[2]{0}', space=sflag, size = 0x8, scoped, tag = 'scoped memory for tpu_custom_call.1']
    #allocation5 [shape = 'u8[32768]{0}', space=vmem, size = 0x8000, scoped, tag = 'output window, operand 0']
    %8 = vsyncpa [#allocation3], 0
    %s9 = scalar_lea.sflag [#allocation3], 1
    %10 = vsyncpa %s9, 0
    %11 = vsyncpa [#allocation4], 0
    %s12 = scalar_lea.sflag [#allocation4], 1
    %13 = vsyncpa %s12, 0
    loop: start=0, step=1, limit=4
    $region2: #{tpu_custom_call.1} parent=1 // loop_pre_header
      _
    $region3: #{tpu_custom_call.1} parent=1 // loop_header
      %s15 = sphi 0, %s19
      %p16 = scmp.ge.s32.totalorder %s15, 4
      %s22 = sphi 0, %s41
      %s23 = sphi 0, %s37
      %s24 = sphi 0, %s33
      %s25 = sphi 0, %s22
      %s26 = sphi 0, %s23
      %s27 = sphi 0, %s24
      %s28 = sphi 0, %s25
      %s29 = sphi 0, %s26
      %s30 = sphi 0, %s27
      %s46 = sphi 0, %s48
      %s49 = sphi 0, %s46
      %s50 = sphi 0, %s49
      %s66 = sphi 0, %s50
      %s76 = sphi 0, %s78
      %s79 = sphi 0, %s76
      %s80 = sphi 0, %s79
      %s96 = sphi 0, %s80
      %s100 = sphi 0, %s100
      %s102 = sphi 0, %s100
      %s103 = sphi 0, %s102
      %s117 = sphi 0, %s103
      %s127 = sphi 0, %s129
      %s130 = sphi 0, %s127
      %s131 = sphi 0, %s130
      %s147 = sphi 0, %s131
    $region4: #{tpu_custom_call.1} parent=1 // loop_header_branch
      %18 = sbr.rel (%p16) target = $region8
    $region5: #{tpu_custom_call.1} parent=1 // loop_body
      %s20 = ssub.s32 %s15, 1
      %s21 = ssub.s32 %s15, 2
      %s31 = sadd.s32 1, %s24
      %p32 = scmp.ge.s32.totalorder %s31, 1
      %s33 = scalar_select %p32, 0, %s31
      %s34 = sadd.s32 1, %s23
      %s35 = scalar_select %p32, %s34, %s23
      %p36 = scmp.ge.s32.totalorder %s35, 1
      %s37 = scalar_select %p36, 0, %s35
      %s38 = sadd.s32 1, %s22
      %s39 = scalar_select %p36, %s38, %s22
      %p40 = scmp.ge.s32.totalorder %s39, 2
      %s41 = scalar_select %p40, 0, %s39
      %s42 = ssub.s32 %s22, %s41
      %s43 = ssub.s32 %s23, %s37
      %s44 = sor.u32 %s42, %s43
      %p45 = scmp.eq.s32.totalorder %s44, 0
      %s47 = sadd.s32 %s46, 1
      %s48 = scalar_select %p45, %s46, %s47
      %p51 = pneg %p45
      %p52 = scmp.eq.s32.totalorder %s15, 1
      %p53 = por %p51, %p52
      %p54 = scmp.ne.s32.totalorder %s46, %s49
      %p55 = scmp.eq.s32.totalorder %s15, 0
      %p56 = por %p54, %p55
      %p57 = scmp.ne.s32.totalorder %s46, %s49
      %p58 = scmp.eq.s32.totalorder %s20, 1
      %p59 = por %p57, %p58
      %p60 = scmp.ne.s32.totalorder %s49, %s50
      %p61 = scmp.eq.s32.totalorder %s20, 0
      %p62 = por %p60, %p61
      %p63 = scmp.ne.s32.totalorder %s49, %s50
      %p64 = scmp.eq.s32.totalorder %s21, 1
      %p65 = por %p63, %p64
      %p67 = scmp.ne.s32.totalorder %s50, %s66
      %p68 = scmp.eq.s32.totalorder %s21, 0
      %p69 = por %p67, %p68
      %s70 = sadd.s32 %s22, %s24
      %s71 = sadd.s32 %s41, %s33
      %s72 = ssub.s32 %s70, %s71
      %s73 = ssub.s32 %s23, %s37
      %s74 = sor.u32 %s72, %s73
      %p75 = scmp.eq.s32.totalorder %s74, 0
      %s77 = sadd.s32 %s76, 1
      %s78 = scalar_select %p75, %s76, %s77
      %p81 = pneg %p75
      %p82 = scmp.eq.s32.totalorder %s15, 1
      %p83 = por %p81, %p82
      %p84 = scmp.ne.s32.totalorder %s76, %s79
      %p85 = scmp.eq.s32.totalorder %s15, 0
      %p86 = por %p84, %p85
      %p87 = scmp.ne.s32.totalorder %s76, %s79
      %p88 = scmp.eq.s32.totalorder %s20, 1
      %p89 = por %p87, %p88
      %p90 = scmp.ne.s32.totalorder %s79, %s80
      %p91 = scmp.eq.s32.totalorder %s20, 0
      %p92 = por %p90, %p91
      %p93 = scmp.ne.s32.totalorder %s79, %s80
      %p94 = scmp.eq.s32.totalorder %s21, 1
      %p95 = por %p93, %p94
      %p97 = scmp.ne.s32.totalorder %s80, %s96
      %p98 = scmp.eq.s32.totalorder %s21, 0
      %p99 = por %p97, %p98
      %s101 = sadd.s32 %s100, 1
      %p104 = scmp.eq.s32.totalorder %s15, 1
      %p105 = scmp.ne.s32.totalorder %s100, %s102
      %p106 = scmp.eq.s32.totalorder %s15, 0
      %p107 = por %p105, %p106
      %p108 = scmp.ne.s32.totalorder %s100, %s102
      %p109 = scmp.eq.s32.totalorder %s20, 1
      %p110 = por %p108, %p109
      %p111 = scmp.ne.s32.totalorder %s102, %s103
      %p112 = scmp.eq.s32.totalorder %s20, 0
      %p113 = por %p111, %p112
      %p114 = scmp.ne.s32.totalorder %s102, %s103
      %p115 = scmp.eq.s32.totalorder %s21, 1
      %p116 = por %p114, %p115
      %p118 = scmp.ne.s32.totalorder %s103, %s117
      %p119 = scmp.eq.s32.totalorder %s21, 0
      %p120 = por %p118, %p119
      %s121 = sadd.s32 %s22, %s24
      %s122 = sadd.s32 %s41, %s33
      %s123 = ssub.s32 %s121, %s122
      %s124 = ssub.s32 %s23, %s37
      %s125 = sor.u32 %s123, %s124
      %p126 = scmp.eq.s32.totalorder %s125, 0
      %s128 = sadd.s32 %s127, 1
      %s129 = scalar_select %p126, %s127, %s128
      %p132 = pneg %p126
      %p133 = scmp.eq.s32.totalorder %s15, 1
      %p134 = por %p132, %p133
      %p135 = scmp.ne.s32.totalorder %s127, %s130
      %p136 = scmp.eq.s32.totalorder %s15, 0
      %p137 = por %p135, %p136
      %p138 = scmp.ne.s32.totalorder %s127, %s130
      %p139 = scmp.eq.s32.totalorder %s20, 1
      %p140 = por %p138, %p139
      %p141 = scmp.ne.s32.totalorder %s130, %s131
      %p142 = scmp.eq.s32.totalorder %s20, 0
      %p143 = por %p141, %p142
      %p144 = scmp.ne.s32.totalorder %s130, %s131
      %p145 = scmp.eq.s32.totalorder %s21, 1
      %p146 = por %p144, %p145
      %p148 = scmp.ne.s32.totalorder %s131, %s147
      %p149 = scmp.eq.s32.totalorder %s21, 0
      %p150 = por %p148, %p149
      %p151 = scmp.le.s32.totalorder 1, %s15
      %p152 = scmp.lt.s32.totalorder %s15, 3
      %p153 = pnand %p151, %p152
      %p154 = pneg %p153
      // Predicated region
      $region9: #{tpu_custom_call.1} parent=5 // pred_check
        _
      $region10: #{tpu_custom_call.1} parent=5 // pred_check_branch
        %156 = sbr.rel (%p153) target = $region12
      $region11: #{tpu_custom_call.1} parent=5 // pred_region
        %s157 = ssub.s32 %s15, 1
        // Predicated region
        $region13: #{tpu_custom_call.1} parent=11 // pred_check
          %p158 = pneg %p113
        $region14: #{tpu_custom_call.1} parent=11 // pred_check_branch
          %160 = sbr.rel (%p158) target = $region16
        $region15: #{tpu_custom_call.1} parent=11 // pred_region
          _
        $region16: #{tpu_custom_call.1} parent=11 // pred_fallthru
          _
      $region12: #{tpu_custom_call.1} parent=5 // pred_fallthru
        _
      %p161 = scmp.lt.s32.totalorder %s15, 2
      // Predicated region
      $region17: #{tpu_custom_call.1} parent=5 // pred_check
        %p162 = pneg %p161
      $region18: #{tpu_custom_call.1} parent=5 // pred_check_branch
        %164 = sbr.rel (%p162) target = $region20
      $region19: #{tpu_custom_call.1} parent=5 // pred_region
        // Predicated region
        $region21: #{tpu_custom_call.1} parent=19 // pred_check
          %p165 = pneg %p56
        $region22: #{tpu_custom_call.1} parent=19 // pred_check_branch
          %167 = sbr.rel (%p165) target = $region24
        $region23: #{tpu_custom_call.1} parent=19 // pred_region
          %p168 = scmp.lt.s32.totalorder %s22, 1
          %s169 = scalar_select %p168, %s22, 1
          %p170 = scmp.lt.s32.totalorder %s23, 0
          %s171 = scalar_select %p170, %s23, 0
          %s172 = sadd.s32 %s171, %s169
          %s173 = smul.addr %s172, 8
          %s174 = scalar_lea.vmem %s0, %s173
        $region24: #{tpu_custom_call.1} parent=19 // pred_fallthru
          _
        // Predicated region
        $region25: #{tpu_custom_call.1} parent=19 // pred_check
          %p175 = pneg %p86
        $region26: #{tpu_custom_call.1} parent=19 // pred_check_branch
          %177 = sbr.rel (%p175) target = $region28
        $region27: #{tpu_custom_call.1} parent=19 // pred_region
          %s178 = sand.u32 %s76, 1
          %s179 = scalar_lea.sflag [#allocation3], %s178
          %s180 = sand.u32 %s76, 1
          %s181 = smul.addr %s180, 32
          %s182 = scalar_lea.vmem [#allocation2], %s181
          %s183 = sadd.s32 %s22, %s24
          %s184 = smul.u32 4, %s183
          %s186 = ssub.s32 512, 512
          %187 = vsyncadd %s179, %s186
          %s188 = sadd.s32 %s23, %s184
          %s189 = smul.addr %s188, 128
          %s190 = scalar_lea.hbm %s1, %s189
          %s191 = sshll.u32 %s182, 4
          %s192 = int_to_ptr.vmem [resolvable:$true] %s191
          %197 = dma.hbm_to_vmem [thread:$0]  %s190, 512, %s192, %s179, 128, 128, 8
        $region28: #{tpu_custom_call.1} parent=19 // pred_fallthru
          _
      $region20: #{tpu_custom_call.1} parent=5 // pred_fallthru
        _
      %p198 = scmp.le.s32.totalorder 1, %s15
      %p199 = scmp.lt.s32.totalorder %s15, 3
      %p200 = pnand %p198, %p199
      %p201 = pneg %p200
      // Predicated region
      $region29: #{tpu_custom_call.1} parent=5 // pred_check
        _
      $region30: #{tpu_custom_call.1} parent=5 // pred_check_branch
        %203 = sbr.rel (%p200) target = $region32
      $region31: #{tpu_custom_call.1} parent=5 // pred_region
        %s204 = ssub.s32 %s15, 1
        %s205 = sand.u32 %s79, 1
        %s206 = scalar_lea.sflag [#allocation3], %s205
        %s207 = sand.u32 %s79, 1
        %s208 = smul.addr %s207, 32
        %s209 = scalar_lea.vmem [#allocation2], %s208
        // Predicated region
        $region33: #{tpu_custom_call.1} parent=31 // pred_check
          %p210 = pneg %p92
        $region34: #{tpu_custom_call.1} parent=31 // pred_check_branch
          %212 = sbr.rel (%p210) target = $region36
        $region35: #{tpu_custom_call.1} parent=31 // pred_region
          %213 = dma.done %s206, 512
        $region36: #{tpu_custom_call.1} parent=31 // pred_fallthru
          _
        %p214 = scmp.lt.s32.totalorder %s25, 1
        %s215 = scalar_select %p214, %s25, 1
        %p216 = scmp.lt.s32.totalorder %s26, 0
        %s217 = scalar_select %p216, %s26, 0
        %s218 = sadd.s32 %s217, %s215
        %s219 = smul.addr %s218, 8
        %s220 = scalar_lea.vmem %s0, %s219
        %p221 = pneg %p62
        %p222 = pneg %p59
        %s223 = sand.u32 %s79, 1
        %s224 = scalar_lea.sflag [#allocation3], %s223
        %s225 = sand.u32 %s79, 1
        %s226 = smul.addr %s225, 32
        %s227 = scalar_lea.vmem [#allocation2], %s226
        %p228 = pneg %p92
        %p229 = pneg %p89
        %p230 = pneg %p113
        %p231 = pneg %p110
        %p232 = pneg %p143
        %p233 = pneg %p140
        %s234 = sand.u32 %s130, 1
        %s235 = scalar_lea.sflag [#allocation4], %s234
        %s236 = sand.u32 %s130, 1
        %s237 = smul.addr %s236, 32
        %s238 = scalar_lea.vmem [#allocation5], %s237
        %p239 = scmp.lt.s32.totalorder %s25, 1
        %s240 = scalar_select %p239, %s25, 1
        %p241 = scmp.lt.s32.totalorder %s26, 0
        %s242 = scalar_select %p241, %s26, 0
        %s243 = sadd.s32 %s242, %s240
        %s244 = smul.addr %s243, 8
        %s245 = scalar_lea.vmem %s0, %s244
        %s246 = sadd.s32 %s25, %s27
        %s247 = smul.u32 4, %s246
        %s248 = sadd.s32 %s25, %s27
        %s249 = smul.u32 4, %s248
        %v250 = vld [vmem:[%s245] sm:$0xff]
        %vm251 = vcmp.ge.s32.totalorder %v250, 2
        %v252 = vand.u32 %v250, 1
        %vm253 = vcmp.eq.s32.totalorder %v252, 1
        %v254 = vld [vmem:[%s2] sm:$0xff]
        %v255 = vld [vmem:[%s2 + $0x8] sm:$0xff]
        %v256 = vld [vmem:[%s209] sm:$0xff]
        %258 = vrot.lane.b32.xlu0 %v256, 112
        %v259 = vpop.permute.xlu0 %258
        %v261 = vsel %vm251, %v259, %v256
        %263 = vrot.lane.b32.xlu0 %v261, 127
        %v264 = vpop.permute.xlu0 %263
        %266 = vrot.lane.b32.xlu0 %v261, 15
        %v267 = vpop.permute.xlu0 %266
        %vm269 = vcmask 121856
        %v270 = vsel %vm269, %v264, %v267
        %v271 = vsel %vm253, %v270, %v261
        %vm272 = vcmask 130048
        %v274 = vsel %vm272, %v271, 0
        %276 = vmatprep.subr.mxu0 0.0
        %277 = vmatpush1.msra.mxu0 %v254
        %278 = vmatprep.subr.mxu0 0.0
        %279 = vmatpush1.msra.mxu0 %v255
        %280 = vmatprep.subr.mxu0 0.0
        %281 = vmatpush1.msra.mxu0 0.0
        %282 = vmatprep.subr.mxu0 0.0
        %283 = vmatpush1.msra.mxu0 0.0
        %284 = vmatprep.subr.mxu0 0.0
        %285 = vmatpush1.msra.mxu0 0.0
        %286 = vmatprep.subr.mxu0 0.0
        %287 = vmatpush1.msra.mxu0 0.0
        %288 = vmatprep.subr.mxu0 0.0
        %289 = vmatpush1.msra.mxu0 0.0
        %290 = vmatprep.subr.mxu0 0.0
        %291 = vmatpush1.msra.mxu0 0.0
        %292 = vmatprep.subr.mxu0 0.0
        %293 = vmatpush1.msra.mxu0 0.0
        %294 = vmatprep.subr.mxu0 0.0
        %295 = vmatpush1.msra.mxu0 0.0
        %296 = vmatprep.subr.mxu0 0.0
        %297 = vmatpush1.msra.mxu0 0.0
        %298 = vmatprep.subr.mxu0 0.0
        %299 = vmatpush1.msra.mxu0 0.0
        %300 = vmatprep.subr.mxu0 0.0
        %301 = vmatpush1.msra.mxu0 0.0
        %302 = vmatprep.subr.mxu0 0.0
        %303 = vmatpush1.msra.mxu0 0.0
        %304 = vmatprep.subr.mxu0 0.0
        %305 = vmatpush1.msra.mxu0 0.0
        %306 = vmatprep.subr.mxu0 0.0
        %307 = vmatpush1.msra.mxu0 0.0
        %308 = vmatprep.subr.mxu0 0.0
        %309 = vmatpush1.msra.mxu0 0.0
        %310 = vmatprep.subr.mxu0 0.0
        %311 = vmatpush1.msra.mxu0 0.0
        %312 = vmatprep.subr.mxu0 0.0
        %313 = vmatpush1.msra.mxu0 0.0
        %314 = vmatprep.subr.mxu0 0.0
        %315 = vmatpush1.msra.mxu0 0.0
        %316 = vmatprep.subr.mxu0 0.0
        %317 = vmatpush1.msra.mxu0 0.0
        %318 = vmatprep.subr.mxu0 0.0
        %319 = vmatpush1.msra.mxu0 0.0
        %320 = vmatprep.subr.mxu0 0.0
        %321 = vmatpush1.msra.mxu0 0.0
        %322 = vmatprep.subr.mxu0 0.0
        %323 = vmatpush1.msra.mxu0 0.0
        %324 = vmatprep.subr.mxu0 0.0
        %325 = vmatpush1.msra.mxu0 0.0
        %326 = vmatprep.subr.mxu0 0.0
        %327 = vmatpush1.msra.mxu0 0.0
        %328 = vmatprep.subr.mxu0 0.0
        %329 = vmatpush1.msra.mxu0 0.0
        %330 = vmatprep.subr.mxu0 0.0
        %331 = vmatpush1.msra.mxu0 0.0
        %332 = vmatprep.subr.mxu0 0.0
        %333 = vmatpush1.msra.mxu0 0.0
        %334 = vmatprep.subr.mxu0 0.0
        %335 = vmatpush1.msra.mxu0 0.0
        %336 = vmatprep.subr.mxu0 0.0
        %337 = vmatpush1.msra.mxu0 0.0
        %338 = vmatprep.subr.mxu0 0.0
        %339 = vmatpush1.msra.mxu0 0.0
        %340 = vmatprep.mubr.f32.mxu0 0.0
        %341 = vmatmul.mubr.f32.gmra.mrb[0].mxu0 %v274
        %v342 = vpop.f32.mrb[0].mxu0
        %v343 = vadd.f32 0.0, %v342
        %v344 = vpop.f32.mrb[0].mxu0
        %345 = vdwg.mxu0
        %vm346 = vcmask 64512
        %347 = vst.msk [vmem:[%s238] sm:$0xff] %vm346, %v343
        %s348 = scalar_lea.vmem %s209, 8 [#allocation2]
        %v349 = vld [vmem:[%s348] sm:$0xff]
        %351 = vrot.lane.b32.xlu0 %v349, 112
        %v352 = vpop.permute.xlu0 %351
        %v354 = vsel %vm251, %v352, %v349
        %356 = vrot.lane.b32.xlu0 %v354, 127
        %v357 = vpop.permute.xlu0 %356
        %359 = vrot.lane.b32.xlu0 %v354, 15
        %v360 = vpop.permute.xlu0 %359
        %v362 = vsel %vm269, %v357, %v360
        %v363 = vsel %vm253, %v362, %v354
        %v365 = vsel %vm272, %v363, 0
        %367 = vmatprep.subr.mxu0 0.0
        %368 = vmatpush1.msra.mxu0 %v254
        %369 = vmatprep.subr.mxu0 0.0
        %370 = vmatpush1.msra.mxu0 %v255
        %371 = vmatprep.subr.mxu0 0.0
        %372 = vmatpush1.msra.mxu0 0.0
        %373 = vmatprep.subr.mxu0 0.0
        %374 = vmatpush1.msra.mxu0 0.0
        %375 = vmatprep.subr.mxu0 0.0
        %376 = vmatpush1.msra.mxu0 0.0
        %377 = vmatprep.subr.mxu0 0.0
        %378 = vmatpush1.msra.mxu0 0.0
        %379 = vmatprep.subr.mxu0 0.0
        %380 = vmatpush1.msra.mxu0 0.0
        %381 = vmatprep.subr.mxu0 0.0
        %382 = vmatpush1.msra.mxu0 0.0
        %383 = vmatprep.subr.mxu0 0.0
        %384 = vmatpush1.msra.mxu0 0.0
        %385 = vmatprep.subr.mxu0 0.0
        %386 = vmatpush1.msra.mxu0 0.0
        %387 = vmatprep.subr.mxu0 0.0
        %388 = vmatpush1.msra.mxu0 0.0
        %389 = vmatprep.subr.mxu0 0.0
        %390 = vmatpush1.msra.mxu0 0.0
        %391 = vmatprep.subr.mxu0 0.0
        %392 = vmatpush1.msra.mxu0 0.0
        %393 = vmatprep.subr.mxu0 0.0
        %394 = vmatpush1.msra.mxu0 0.0
        %395 = vmatprep.subr.mxu0 0.0
        %396 = vmatpush1.msra.mxu0 0.0
        %397 = vmatprep.subr.mxu0 0.0
        %398 = vmatpush1.msra.mxu0 0.0
        %399 = vmatprep.subr.mxu0 0.0
        %400 = vmatpush1.msra.mxu0 0.0
        %401 = vmatprep.subr.mxu0 0.0
        %402 = vmatpush1.msra.mxu0 0.0
        %403 = vmatprep.subr.mxu0 0.0
        %404 = vmatpush1.msra.mxu0 0.0
        %405 = vmatprep.subr.mxu0 0.0
        %406 = vmatpush1.msra.mxu0 0.0
        %407 = vmatprep.subr.mxu0 0.0
        %408 = vmatpush1.msra.mxu0 0.0
        %409 = vmatprep.subr.mxu0 0.0
        %410 = vmatpush1.msra.mxu0 0.0
        %411 = vmatprep.subr.mxu0 0.0
        %412 = vmatpush1.msra.mxu0 0.0
        %413 = vmatprep.subr.mxu0 0.0
        %414 = vmatpush1.msra.mxu0 0.0
        %415 = vmatprep.subr.mxu0 0.0
        %416 = vmatpush1.msra.mxu0 0.0
        %417 = vmatprep.subr.mxu0 0.0
        %418 = vmatpush1.msra.mxu0 0.0
        %419 = vmatprep.subr.mxu0 0.0
        %420 = vmatpush1.msra.mxu0 0.0
        %421 = vmatprep.subr.mxu0 0.0
        %422 = vmatpush1.msra.mxu0 0.0
        %423 = vmatprep.subr.mxu0 0.0
        %424 = vmatpush1.msra.mxu0 0.0
        %425 = vmatprep.subr.mxu0 0.0
        %426 = vmatpush1.msra.mxu0 0.0
        %427 = vmatprep.subr.mxu0 0.0
        %428 = vmatpush1.msra.mxu0 0.0
        %429 = vmatprep.subr.mxu0 0.0
        %430 = vmatpush1.msra.mxu0 0.0
        %431 = vmatprep.mubr.f32.mxu0 0.0
        %432 = vmatmul.mubr.f32.gmra.mrb[0].mxu0 %v365
        %v433 = vpop.f32.mrb[0].mxu0
        %v434 = vadd.f32 0.0, %v433
        %v435 = vpop.f32.mrb[0].mxu0
        %436 = vdwg.mxu0
        %s437 = scalar_lea.vmem %s238, 8 [#allocation5]
        %438 = vst.msk [vmem:[%s437] sm:$0xff] %vm346, %v434
        %s439 = scalar_lea.vmem %s209, 16 [#allocation2]
        %v440 = vld [vmem:[%s439] sm:$0xff]
        %442 = vrot.lane.b32.xlu0 %v440, 112
        %v443 = vpop.permute.xlu0 %442
        %v445 = vsel %vm251, %v443, %v440
        %447 = vrot.lane.b32.xlu0 %v445, 127
        %v448 = vpop.permute.xlu0 %447
        %450 = vrot.lane.b32.xlu0 %v445, 15
        %v451 = vpop.permute.xlu0 %450
        %v453 = vsel %vm269, %v448, %v451
        %v454 = vsel %vm253, %v453, %v445
        %v456 = vsel %vm272, %v454, 0
        %458 = vmatprep.subr.mxu0 0.0
        %459 = vmatpush1.msra.mxu0 %v254
        %460 = vmatprep.subr.mxu0 0.0
        %461 = vmatpush1.msra.mxu0 %v255
        %462 = vmatprep.subr.mxu0 0.0
        %463 = vmatpush1.msra.mxu0 0.0
        %464 = vmatprep.subr.mxu0 0.0
        %465 = vmatpush1.msra.mxu0 0.0
        %466 = vmatprep.subr.mxu0 0.0
        %467 = vmatpush1.msra.mxu0 0.0
        %468 = vmatprep.subr.mxu0 0.0
        %469 = vmatpush1.msra.mxu0 0.0
        %470 = vmatprep.subr.mxu0 0.0
        %471 = vmatpush1.msra.mxu0 0.0
        %472 = vmatprep.subr.mxu0 0.0
        %473 = vmatpush1.msra.mxu0 0.0
        %474 = vmatprep.subr.mxu0 0.0
        %475 = vmatpush1.msra.mxu0 0.0
        %476 = vmatprep.subr.mxu0 0.0
        %477 = vmatpush1.msra.mxu0 0.0
        %478 = vmatprep.subr.mxu0 0.0
        %479 = vmatpush1.msra.mxu0 0.0
        %480 = vmatprep.subr.mxu0 0.0
        %481 = vmatpush1.msra.mxu0 0.0
        %482 = vmatprep.subr.mxu0 0.0
        %483 = vmatpush1.msra.mxu0 0.0
        %484 = vmatprep.subr.mxu0 0.0
        %485 = vmatpush1.msra.mxu0 0.0
        %486 = vmatprep.subr.mxu0 0.0
        %487 = vmatpush1.msra.mxu0 0.0
        %488 = vmatprep.subr.mxu0 0.0
        %489 = vmatpush1.msra.mxu0 0.0
        %490 = vmatprep.subr.mxu0 0.0
        %491 = vmatpush1.msra.mxu0 0.0
        %492 = vmatprep.subr.mxu0 0.0
        %493 = vmatpush1.msra.mxu0 0.0
        %494 = vmatprep.subr.mxu0 0.0
        %495 = vmatpush1.msra.mxu0 0.0
        %496 = vmatprep.subr.mxu0 0.0
        %497 = vmatpush1.msra.mxu0 0.0
        %498 = vmatprep.subr.mxu0 0.0
        %499 = vmatpush1.msra.mxu0 0.0
        %500 = vmatprep.subr.mxu0 0.0
        %501 = vmatpush1.msra.mxu0 0.0
        %502 = vmatprep.subr.mxu0 0.0
        %503 = vmatpush1.msra.mxu0 0.0
        %504 = vmatprep.subr.mxu0 0.0
        %505 = vmatpush1.msra.mxu0 0.0
        %506 = vmatprep.subr.mxu0 0.0
        %507 = vmatpush1.msra.mxu0 0.0
        %508 = vmatprep.subr.mxu0 0.0
        %509 = vmatpush1.msra.mxu0 0.0
        %510 = vmatprep.subr.mxu0 0.0
        %511 = vmatpush1.msra.mxu0 0.0
        %512 = vmatprep.subr.mxu0 0.0
        %513 = vmatpush1.msra.mxu0 0.0
        %514 = vmatprep.subr.mxu0 0.0
        %515 = vmatpush1.msra.mxu0 0.0
        %516 = vmatprep.subr.mxu0 0.0
        %517 = vmatpush1.msra.mxu0 0.0
        %518 = vmatprep.subr.mxu0 0.0
        %519 = vmatpush1.msra.mxu0 0.0
        %520 = vmatprep.subr.mxu0 0.0
        %521 = vmatpush1.msra.mxu0 0.0
        %522 = vmatprep.mubr.f32.mxu0 0.0
        %523 = vmatmul.mubr.f32.gmra.mrb[0].mxu0 %v456
        %v524 = vpop.f32.mrb[0].mxu0
        %v525 = vadd.f32 0.0, %v524
        %v526 = vpop.f32.mrb[0].mxu0
        %527 = vdwg.mxu0
        %s528 = scalar_lea.vmem %s238, 16 [#allocation5]
        %529 = vst.msk [vmem:[%s528] sm:$0xff] %vm346, %v525
        %s530 = scalar_lea.vmem %s209, 24 [#allocation2]
        %v531 = vld [vmem:[%s530] sm:$0xff]
        %533 = vrot.lane.b32.xlu0 %v531, 112
        %v534 = vpop.permute.xlu0 %533
        %v536 = vsel %vm251, %v534, %v531
        %538 = vrot.lane.b32.xlu0 %v536, 127
        %v539 = vpop.permute.xlu0 %538
        %541 = vrot.lane.b32.xlu0 %v536, 15
        %v542 = vpop.permute.xlu0 %541
        %v544 = vsel %vm269, %v539, %v542
        %v545 = vsel %vm253, %v544, %v536
        %v547 = vsel %vm272, %v545, 0
        %549 = vmatprep.subr.mxu0 0.0
        %550 = vmatpush1.msra.mxu0 %v254
        %551 = vmatprep.subr.mxu0 0.0
        %552 = vmatpush1.msra.mxu0 %v255
        %553 = vmatprep.subr.mxu0 0.0
        %554 = vmatpush1.msra.mxu0 0.0
        %555 = vmatprep.subr.mxu0 0.0
        %556 = vmatpush1.msra.mxu0 0.0
        %557 = vmatprep.subr.mxu0 0.0
        %558 = vmatpush1.msra.mxu0 0.0
        %559 = vmatprep.subr.mxu0 0.0
        %560 = vmatpush1.msra.mxu0 0.0
        %561 = vmatprep.subr.mxu0 0.0
        %562 = vmatpush1.msra.mxu0 0.0
        %563 = vmatprep.subr.mxu0 0.0
        %564 = vmatpush1.msra.mxu0 0.0
        %565 = vmatprep.subr.mxu0 0.0
        %566 = vmatpush1.msra.mxu0 0.0
        %567 = vmatprep.subr.mxu0 0.0
        %568 = vmatpush1.msra.mxu0 0.0
        %569 = vmatprep.subr.mxu0 0.0
        %570 = vmatpush1.msra.mxu0 0.0
        %571 = vmatprep.subr.mxu0 0.0
        %572 = vmatpush1.msra.mxu0 0.0
        %573 = vmatprep.subr.mxu0 0.0
        %574 = vmatpush1.msra.mxu0 0.0
        %575 = vmatprep.subr.mxu0 0.0
        %576 = vmatpush1.msra.mxu0 0.0
        %577 = vmatprep.subr.mxu0 0.0
        %578 = vmatpush1.msra.mxu0 0.0
        %579 = vmatprep.subr.mxu0 0.0
        %580 = vmatpush1.msra.mxu0 0.0
        %581 = vmatprep.subr.mxu0 0.0
        %582 = vmatpush1.msra.mxu0 0.0
        %583 = vmatprep.subr.mxu0 0.0
        %584 = vmatpush1.msra.mxu0 0.0
        %585 = vmatprep.subr.mxu0 0.0
        %586 = vmatpush1.msra.mxu0 0.0
        %587 = vmatprep.subr.mxu0 0.0
        %588 = vmatpush1.msra.mxu0 0.0
        %589 = vmatprep.subr.mxu0 0.0
        %590 = vmatpush1.msra.mxu0 0.0
        %591 = vmatprep.subr.mxu0 0.0
        %592 = vmatpush1.msra.mxu0 0.0
        %593 = vmatprep.subr.mxu0 0.0
        %594 = vmatpush1.msra.mxu0 0.0
        %595 = vmatprep.subr.mxu0 0.0
        %596 = vmatpush1.msra.mxu0 0.0
        %597 = vmatprep.subr.mxu0 0.0
        %598 = vmatpush1.msra.mxu0 0.0
        %599 = vmatprep.subr.mxu0 0.0
        %600 = vmatpush1.msra.mxu0 0.0
        %601 = vmatprep.subr.mxu0 0.0
        %602 = vmatpush1.msra.mxu0 0.0
        %603 = vmatprep.subr.mxu0 0.0
        %604 = vmatpush1.msra.mxu0 0.0
        %605 = vmatprep.subr.mxu0 0.0
        %606 = vmatpush1.msra.mxu0 0.0
        %607 = vmatprep.subr.mxu0 0.0
        %608 = vmatpush1.msra.mxu0 0.0
        %609 = vmatprep.subr.mxu0 0.0
        %610 = vmatpush1.msra.mxu0 0.0
        %611 = vmatprep.subr.mxu0 0.0
        %612 = vmatpush1.msra.mxu0 0.0
        %613 = vmatprep.mubr.f32.mxu0 0.0
        %614 = vmatmul.mubr.f32.gmra.mrb[0].mxu0 %v547
        %v615 = vpop.f32.mrb[0].mxu0
        %v616 = vadd.f32 0.0, %v615
        %v617 = vpop.f32.mrb[0].mxu0
        %618 = vdwg.mxu0
        %s619 = scalar_lea.vmem %s238, 24 [#allocation5]
        %620 = vst.msk [vmem:[%s619] sm:$0xff] %vm346, %v616
        %s621 = sand.u32 %s130, 1
        %s622 = scalar_lea.sflag [#allocation4], %s621
        %s623 = sand.u32 %s130, 1
        %s624 = smul.addr %s623, 32
        %s625 = scalar_lea.vmem [#allocation5], %s624
        // Predicated region
        $region37: #{tpu_custom_call.1} parent=31 // pred_check
          %p626 = pneg %p140
        $region38: #{tpu_custom_call.1} parent=31 // pred_check_branch
          %628 = sbr.rel (%p626) target = $region40
        $region39: #{tpu_custom_call.1} parent=31 // pred_region
          %s629 = sadd.s32 %s25, %s27
          %s630 = smul.u32 4, %s629
          %s632 = ssub.s32 512, 512
          %633 = vsyncadd %s622, %s632
          %s634 = sadd.s32 %s26, %s630
          %s635 = smul.addr %s634, 128
          %s636 = scalar_lea.hbm %s3, %s635
          %s637 = sshll.u32 %s625, 4
          %s638 = int_to_ptr.vmem [resolvable:$true] %s637
          %643 = dma.vmem_to_hbm [thread:$0]  %s638, 512, %s636, %s622, 128, 128, 8
        $region40: #{tpu_custom_call.1} parent=31 // pred_fallthru
          _
      $region32: #{tpu_custom_call.1} parent=5 // pred_fallthru
        _
      %p644 = scmp.le.s32.totalorder 2, %s15
      // Predicated region
      $region41: #{tpu_custom_call.1} parent=5 // pred_check
        %p645 = pneg %p644
      $region42: #{tpu_custom_call.1} parent=5 // pred_check_branch
        %647 = sbr.rel (%p645) target = $region44
      $region43: #{tpu_custom_call.1} parent=5 // pred_region
        %s648 = ssub.s32 %s15, 2
        // Predicated region
        $region45: #{tpu_custom_call.1} parent=43 // pred_check
          %p649 = pneg %p146
        $region46: #{tpu_custom_call.1} parent=43 // pred_check_branch
          %651 = sbr.rel (%p649) target = $region48
        $region47: #{tpu_custom_call.1} parent=43 // pred_region
          %s652 = sand.u32 %s131, 1
          %s653 = scalar_lea.sflag [#allocation4], %s652
          %s654 = sand.u32 %s131, 1
          %s655 = smul.addr %s654, 32
          %s656 = scalar_lea.vmem [#allocation5], %s655
          %657 = dma.done %s653, 512
        $region48: #{tpu_custom_call.1} parent=43 // pred_fallthru
          _
      $region44: #{tpu_custom_call.1} parent=5 // pred_fallthru
        _
    $region6: #{tpu_custom_call.1} parent=1 // loop_footer
      %s19 = sadd.s32 1, %s15
    $region7: #{tpu_custom_call.1} parent=1 // loop_footer_branch
      %14 = sbr.rel target = $region3
    $region8: #{tpu_custom_call.1} parent=1 // loop_exit
      _
    %658 = vsyncpa [#allocation3], 1
    %s659 = scalar_lea.sflag [#allocation3], 1
    %660 = vsyncpa %s659, 1
    %661 = vsyncpa [#allocation4], 1
    %s662 = scalar_lea.sflag [#allocation4], 1
    %663 = vsyncpa %s662, 1

</llo_original>
